<compile_context>
chip_gen: v5e
topology: v5e:2x2
jax: 0.10.0
libtpu: 0.0.40
codegen_flags: <defaults>
</compile_context>

<pallas_src>
import functools

import jax
import jax.numpy as jnp
from jax.experimental import pallas as pl
from jax.experimental.pallas import tpu as pltpu

EPS = 1e-5
_LANE = 128
_TARGET_BLOCK_BYTES = 8 * 1024 * 1024   # x+y+out bytes per tiled grid step


def _vmem_budget_bytes() -> int:
    """Per-chip VMEM budget (~half of physical). 32 MiB fallback is safe everywhere."""
    phys = 64 * 1024 * 1024
    try:
        info = pltpu.get_tpu_info()
        phys = int(getattr(info, "vmem_capacity_bytes", phys))
    except Exception:
        pass
    return max(16 * 1024 * 1024, phys // 2)


_VMEM_BUDGET = _vmem_budget_bytes()


def _round_up(x: int, m: int) -> int:
    return (x + m - 1) // m * m


# ----------------------------------------------------------------------------
# Kernels (layout: channels on sublanes, spatial HW on lanes)
# ----------------------------------------------------------------------------
def _spade_fused_kernel(x_ref, y_ref, w1_ref, b1_ref, wgb_ref, bgb_ref, o_ref,
                        *, c, hw_total, padded):
    """Single-block path: whole (C, HW_pad) image per batch element."""
    x = x_ref[0]                                        # (C, HWp)    f32
    y = y_ref[0]                                        # (Cseg, HWp) f32

    # Instance-norm statistics: lane-axis reductions -> XLU, rsqrt -> EUP.
    # Zero padding contributes nothing to the sum; divide by the REAL hw.
    inv_hw = 1.0 / hw_total
    mean = jnp.sum(x, axis=1, keepdims=True) * inv_hw                 # (C, 1)
    xc = x - mean
    if padded:
        valid = jax.lax.broadcasted_iota(jnp.int32, x.shape, 1) < hw_total
        xc_stat = jnp.where(valid, xc, 0.0)
    else:
        xc_stat = xc
    var = jnp.sum(xc_stat * xc_stat, axis=1, keepdims=True) * inv_hw  # (C, 1)
    x_norm = xc * jax.lax.rsqrt(var + EPS)                            # (C, HWp)

    # SPADE modulation: 1x1 convs == (Cout, Cin) @ (Cin, HW) MXU matmuls.
    shared = jnp.dot(w1_ref[...], y, preferred_element_type=jnp.float32)
    shared = jnp.maximum(shared + b1_ref[...], 0.0)                   # (hid, HWp)
    gb = jnp.dot(wgb_ref[...], shared,
                 preferred_element_type=jnp.float32) + bgb_ref[...]   # (2C, HWp)
    gamma = gb[:c]
    beta = gb[c:]

    # Padded lanes hold garbage here; the wrapper slices them off.
    o_ref[0] = x_norm * (1.0 + gamma) + beta


def _stats_kernel(x_ref, mean_ref, rstd_ref, shift_sc, sum_sc, ssq_sc,
                  *, hw_total, hw_tile, padded):
    """Pass 1 (tiled HW): per-(n, c) mean / rsqrt(var), shifted for stability."""
    t = pl.program_id(1)
    x = x_ref[0]                                        # (C, hw_tile)

    if padded:
        lane = jax.lax.broadcasted_iota(jnp.int32, x.shape, 1)
        valid = (lane + t * hw_tile) < hw_total

    @pl.when(t == 0)
    def _():
        # Shift = mean of the first tile (numerically-stable centered-ish form).
        first_valid = min(hw_tile, hw_total)
        x0 = jnp.where(valid, x, 0.0) if padded else x
        shift_sc[...] = jnp.sum(x0, axis=1, keepdims=True) * (1.0 / first_valid)
        sum_sc[...] = jnp.zeros_like(sum_sc)
        ssq_sc[...] = jnp.zeros_like(ssq_sc)

    xs = x - shift_sc[...]
    if padded:
        xs = jnp.where(valid, xs, 0.0)
    sum_sc[...] += jnp.sum(xs, axis=1, keepdims=True)
    ssq_sc[...] += jnp.sum(xs * xs, axis=1, keepdims=True)

    @pl.when(t == pl.num_programs(1) - 1)
    def _():
        inv_n = 1.0 / hw_total
        d = sum_sc[...] * inv_n
        var = ssq_sc[...] * inv_n - d * d        # shifted data -> |d| is tiny
        mean_ref[0] = shift_sc[...] + d
        rstd_ref[0] = jax.lax.rsqrt(var + EPS)


def _apply_kernel(x_ref, y_ref, mean_ref, rstd_ref,
                  w1_ref, b1_ref, wgb_ref, bgb_ref, o_ref, *, c):
    """Pass 2 (tiled HW): modulation + normalization using precomputed stats."""
    x = x_ref[0]                                        # (C, hw_tile)
    y = y_ref[0]                                        # (Cseg, hw_tile)

    shared = jnp.dot(w1_ref[...], y, preferred_element_type=jnp.float32)
    shared = jnp.maximum(shared + b1_ref[...], 0.0)                   # (hid, t)
    gb = jnp.dot(wgb_ref[...], shared,
                 preferred_element_type=jnp.float32) + bgb_ref[...]   # (2C, t)
    gamma = gb[:c]
    beta = gb[c:]

    x_norm = (x - mean_ref[0]) * rstd_ref[0]
    o_ref[0] = x_norm * (1.0 + gamma) + beta


# ----------------------------------------------------------------------------
# Wrapper
# ----------------------------------------------------------------------------
def _pad_hw(a, hw_pad):
    hw = a.shape[-1]
    if hw_pad == hw:
        return a
    return jnp.pad(a, ((0, 0), (0, 0), (0, hw_pad - hw)))


@functools.partial(jax.jit, static_argnames=("force_path", "hw_tile_override"))
def spade_pallas(x0_nchw, y0_nchw, params, *, force_path=None,
                 hw_tile_override=None):
    """Inner module: SPADE-lite conditional norm.  NCHW in, NCHW out.

    force_path: None (auto, VMEM-driven), "fused", or "tiled" (testing hook).
    hw_tile_override: force the tiled-path HW tile (multiple of 128).
    """
    n, c, h, w = x0_nchw.shape
    _, cseg, _, _ = y0_nchw.shape
    hw = h * w
    hidden = params["w1"].shape[0]

    # NCHW -> (N, C, HW): a free reshape (no transpose, no extra HBM traffic).
    x = x0_nchw.reshape(n, c, hw)
    y = y0_nchw.reshape(n, cseg, hw)

    # Fuse gamma/beta projections into a single matmul.
    w1 = params["w1"]                                                # (hid, Cseg)
    b1 = params["b1"].reshape(hidden, 1)
    w_gb = jnp.concatenate([params["wg"], params["wb"]], axis=0)     # (2C, hid)
    b_gb = jnp.concatenate([params["bg"], params["bb"]], axis=0).reshape(2 * c, 1)

    vmem_budget = _VMEM_BUDGET
    weight_bytes = 4 * 2 * (hidden * cseg + hidden + 2 * c * hidden + 2 * c)

    # Working-set bytes per lane column (f32): double-buffered x/y/out blocks,
    # shared + gb intermediates, and ~2C of slack for vreg/VMEM temporaries.
    per_lane = 4 * (2 * c + 2 * cseg + 2 * c + hidden + 2 * c + 2 * c)

    hw_pad128 = _round_up(hw, _LANE)
    fused_bytes = hw_pad128 * per_lane + weight_bytes
    use_fused = fused_bytes <= int(0.85 * vmem_budget)
    if force_path == "fused":
        use_fused = True
    elif force_path == "tiled":
        use_fused = False

    if use_fused:
        # Whole image per block: fused single pass, one HBM read of x.
        hw_pad = hw_pad128
        padded = hw_pad != hw
        matmul_flops = 2 * n * hw_pad * (cseg * hidden + hidden * 2 * c)
        # NOTE: grid=(n,) — on v7x (2 TCs) batch n>=2 is needed for megacore;
        # at n==1 one core idles (no-op on v5e/v6e).
        out = pl.pallas_call(
            functools.partial(_spade_fused_kernel, c=c, hw_total=hw,
                              padded=padded),
            out_shape=jax.ShapeDtypeStruct((n, c, hw_pad), jnp.float32),
            grid_spec=pltpu.PrefetchScalarGridSpec(
                num_scalar_prefetch=0,
                grid=(n,),
                in_specs=[
                    pl.BlockSpec((1, c, hw_pad), lambda i: (i, 0, 0)),
                    pl.BlockSpec((1, cseg, hw_pad), lambda i: (i, 0, 0)),
                    pl.BlockSpec((hidden, cseg), lambda i: (0, 0)),
                    pl.BlockSpec((hidden, 1), lambda i: (0, 0)),
                    pl.BlockSpec((2 * c, hidden), lambda i: (0, 0)),
                    pl.BlockSpec((2 * c, 1), lambda i: (0, 0)),
                ],
                out_specs=pl.BlockSpec((1, c, hw_pad), lambda i: (i, 0, 0)),
            ),
            compiler_params=pltpu.CompilerParams(
                dimension_semantics=("parallel",),
                vmem_limit_bytes=vmem_budget),
            cost_estimate=pl.CostEstimate(
                flops=matmul_flops + 8 * n * c * hw_pad,
                transcendentals=n * c,
                bytes_accessed=4 * n * hw_pad * (2 * c + cseg)),
        )(_pad_hw(x, hw_pad), _pad_hw(y, hw_pad), w1, b1, w_gb, b_gb)
        if padded:
            out = out[:, :, :hw]
        return out.reshape(n, c, h, w)

    # ---- image too large for one VMEM block: two passes, tiled over HW ------
    # Tile size by bytes (amortize ~0.35us/step overhead), capped by VMEM.
    if hw_tile_override is not None:
        hw_tile_max = max(_LANE, _round_up(int(hw_tile_override), _LANE))
    else:
        cap_by_vmem = (int(0.85 * vmem_budget) - weight_bytes) // per_lane
        cap_by_vmem = max(_LANE, cap_by_vmem // _LANE * _LANE)
        cap_by_target = max(_LANE,
                            _TARGET_BLOCK_BYTES // (4 * (2 * c + cseg))
                            // _LANE * _LANE)
        hw_tile_max = min(cap_by_vmem, cap_by_target, hw_pad128)

    n_tiles = -(-hw // hw_tile_max)                       # cdiv
    hw_tile = _round_up(-(-hw // n_tiles), _LANE)         # balanced tiles
    hw_pad = n_tiles * hw_tile
    padded = hw_pad != hw

    xp = _pad_hw(x, hw_pad)
    yp = _pad_hw(y, hw_pad)
    matmul_flops = 2 * n * hw_pad * (cseg * hidden + hidden * 2 * c)

    # Pass 1: per-(n, c) mean and rsqrt(var) via shifted accumulate/finalize.
    mean, rstd = pl.pallas_call(
        functools.partial(_stats_kernel, hw_total=hw, hw_tile=hw_tile,
                          padded=padded),
        out_shape=(jax.ShapeDtypeStruct((n, c, 1), jnp.float32),
                   jax.ShapeDtypeStruct((n, c, 1), jnp.float32)),
        grid_spec=pltpu.PrefetchScalarGridSpec(
            num_scalar_prefetch=0,
            grid=(n, n_tiles),
            in_specs=[pl.BlockSpec((1, c, hw_tile), lambda i, t: (i, 0, t))],
            out_specs=(pl.BlockSpec((1, c, 1), lambda i, t: (i, 0, 0)),
                       pl.BlockSpec((1, c, 1), lambda i, t: (i, 0, 0))),
            scratch_shapes=[pltpu.VMEM((c, 1), jnp.float32),
                            pltpu.VMEM((c, 1), jnp.float32),
                            pltpu.VMEM((c, 1), jnp.float32)],
        ),
        compiler_params=pltpu.CompilerParams(
            dimension_semantics=("parallel", "arbitrary"),
            vmem_limit_bytes=vmem_budget),
        cost_estimate=pl.CostEstimate(
            flops=4 * n * c * hw_pad,
            transcendentals=n * c,
            bytes_accessed=4 * n * c * hw_pad),
    )(xp)

    # Pass 2: modulation + normalization, fully pipelined over HW tiles.
    out = pl.pallas_call(
        functools.partial(_apply_kernel, c=c),
        out_shape=jax.ShapeDtypeStruct((n, c, hw_pad), jnp.float32),
        grid_spec=pltpu.PrefetchScalarGridSpec(
            num_scalar_prefetch=0,
            grid=(n, n_tiles),
            in_specs=[
                pl.BlockSpec((1, c, hw_tile), lambda i, t: (i, 0, t)),
                pl.BlockSpec((1, cseg, hw_tile), lambda i, t: (i, 0, t)),
                pl.BlockSpec((1, c, 1), lambda i, t: (i, 0, 0)),
                pl.BlockSpec((1, c, 1), lambda i, t: (i, 0, 0)),
                pl.BlockSpec((hidden, cseg), lambda i, t: (0, 0)),
                pl.BlockSpec((hidden, 1), lambda i, t: (0, 0)),
                pl.BlockSpec((2 * c, hidden), lambda i, t: (0, 0)),
                pl.BlockSpec((2 * c, 1), lambda i, t: (0, 0)),
            ],
            out_specs=pl.BlockSpec((1, c, hw_tile), lambda i, t: (i, 0, t)),
        ),
        compiler_params=pltpu.CompilerParams(
            dimension_semantics=("parallel", "parallel"),
            vmem_limit_bytes=vmem_budget),
        cost_estimate=pl.CostEstimate(
            flops=matmul_flops + 6 * n * c * hw_pad,
            transcendentals=0,
            bytes_accessed=4 * n * hw_pad * (2 * c + cseg)),
    )(xp, yp, mean, rstd, w1, b1, w_gb, b_gb)
    if padded:
        out = out[:, :, :hw]
    return out.reshape(n, c, h, w)


def tuple_left2(x_tuple, y_tuple, params, **kwargs):
    """TupleLeft2.forward: apply the module on (x[0], y[0]), keep x[1]."""
    assert isinstance(x_tuple, tuple) and len(x_tuple) == 2, \
        f"type: {type(x_tuple)}, len={len(x_tuple)}"
    r1 = spade_pallas(x_tuple[0], y_tuple[0], params, **kwargs)
    return (r1, x_tuple[1])


# ----------------------------------------------------------------------------
# Pure-JAX reference (NCHW; conv1x1 weights are (Cout, Cin), biases (Cout,))
# ----------------------------------------------------------------------------
def _reference(x0, y0, params):
    mean = jnp.mean(x0, axis=(2, 3), keepdims=True)
    var = jnp.mean((x0 - mean) ** 2, axis=(2, 3), keepdims=True)
    xn = (x0 - mean) * jax.lax.rsqrt(var + EPS)

    def conv1x1(inp, w, b):
        return jnp.einsum('oc,nchw->nohw', w, inp) + b[None, :, None, None]

    shared = jax.nn.relu(conv1x1(y0, params["w1"], params["b1"]))
    gamma = conv1x1(shared, params["wg"], params["bg"])
    beta = conv1x1(shared, params["wb"], params["bb"])
    return xn * (1.0 + gamma) + beta


if __name__ == "__main__":
    key = jax.random.PRNGKey(0)
    keys = jax.random.split(key, 10)
    k_x0, k_x1, k_y0, k_w1, k_b1, k_wg, k_bg, k_wb, k_bb, k_odd = keys

    N, C, H, W = 2, 4, 16, 16
    CSEG, HIDDEN = 3, 32

    x0 = jax.random.normal(k_x0, (N, C, H, W), jnp.float32)
    x1 = jax.random.normal(k_x1, (N, C, H, W), jnp.float32)   # passthrough
    y0 = jax.random.normal(k_y0, (N, CSEG, H, W), jnp.float32)

    params = {
        "w1": jax.random.normal(k_w1, (HIDDEN, CSEG), jnp.float32) * 0.1,
        "b1": jax.random.normal(k_b1, (HIDDEN,), jnp.float32) * 0.1,
        "wg": jax.random.normal(k_wg, (C, HIDDEN), jnp.float32) * 0.1,
        "bg": jax.random.normal(k_bg, (C,), jnp.float32) * 0.1,
        "wb": jax.random.normal(k_wb, (C, HIDDEN), jnp.float32) * 0.1,
        "bb": jax.random.normal(k_bb, (C,), jnp.float32) * 0.1,
    }

    ref = _reference(x0, y0, params)

    # 1) Auto path (HW = 256 -> fused single block, lane-dense).
    r1, r2 = tuple_left2((x0, x1), (y0, None), params)
    jax.block_until_ready((r1, r2))
    assert jnp.allclose(r1, ref, atol=1e-4, rtol=1e-4), "fused path mismatch"
    assert jnp.array_equal(r2, x1), "second element must pass through unchanged"

    # 2) Two-pass HW-tiled path (force 128-lane tiles to exercise it).
    r1_tiled = spade_pallas(x0, y0, params, force_path="tiled",
                            hw_tile_override=128)
    jax.block_until_ready(r1_tiled)
    assert jnp.allclose(r1_tiled, ref, atol=1e-4, rtol=1e-4), "tiled path mismatch"

    # 3) Non-128-multiple spatial extent (15x15 -> padded to 256 lanes),
    #    both fused and tiled paths, to exercise the padding/masking logic.
    Ho, Wo = 15, 15
    x0_odd = jax.random.normal(k_odd, (N, C, Ho, Wo), jnp.float32) + 3.0
    y0_odd = jax.random.normal(k_y0, (N, CSEG, Ho, Wo), jnp.float32)
    ref_odd = _reference(x0_odd, y0_odd, params)

    r_odd_fused = spade_pallas(x0_odd, y0_odd, params)
    jax.block_until_ready(r_odd_fused)
    assert jnp.allclose(r_odd_fused, ref_odd, atol=1e-4, rtol=1e-4), \
        "padded fused path mismatch"

    r_odd_tiled = spade_pallas(x0_odd, y0_odd, params, force_path="tiled",
                               hw_tile_override=128)
    jax.block_until_ready(r_odd_tiled)
    assert jnp.allclose(r_odd_tiled, ref_odd, atol=1e-4, rtol=1e-4), \
        "padded tiled path mismatch"

    print("KERNEL_OK")
</pallas_src>

<mosaic_0001>
module attributes {stable_mosaic.version = 11 : i64} {
  func.func @_spade_fused_kernel(%arg0: i32, %arg1: memref<1x4x256xf32, #tpu.memory_space<vmem>>, %arg2: memref<1x3x256xf32, #tpu.memory_space<vmem>>, %arg3: memref<32x3xf32, #tpu.memory_space<vmem>>, %arg4: memref<32x1xf32, #tpu.memory_space<vmem>>, %arg5: memref<8x32xf32, #tpu.memory_space<vmem>>, %arg6: memref<8x1xf32, #tpu.memory_space<vmem>>, %arg7: memref<1x4x256xf32, #tpu.memory_space<vmem>>) attributes {dimension_semantics = [#tpu.dimension_semantics<parallel>], iteration_bounds = array<i64: 2>, scalar_prefetch = 0 : i64, scratch_operands = 0 : i64, tpu.core_type = #tpu.core_type<tc>, window_params = [{transform_indices = @transform_0, window_bounds = array<i64: 1, 4, 256>}, {transform_indices = @transform_1, window_bounds = array<i64: 1, 3, 256>}, {pipeline_mode = #tpu.pipeline_mode<synchronous>, transform_indices = @transform_2, window_bounds = array<i64: 32, 3>}, {pipeline_mode = #tpu.pipeline_mode<synchronous>, transform_indices = @transform_3, window_bounds = array<i64: 32, 1>}, {pipeline_mode = #tpu.pipeline_mode<synchronous>, transform_indices = @transform_4, window_bounds = array<i64: 8, 32>}, {pipeline_mode = #tpu.pipeline_mode<synchronous>, transform_indices = @transform_5, window_bounds = array<i64: 8, 1>}, {transform_indices = @transform_6, window_bounds = array<i64: 1, 4, 256>}]} {
    %c0 = arith.constant 0 : index
    %c0_0 = arith.constant 0 : index
    %c0_1 = arith.constant 0 : index
    %0 = vector.load %arg1[%c0, %c0_0, %c0_1] : memref<1x4x256xf32, #tpu.memory_space<vmem>>, vector<1x4x256xf32>
    %1 = vector.shape_cast %0 : vector<1x4x256xf32> to vector<4x256xf32>
    %c0_2 = arith.constant 0 : index
    %c0_3 = arith.constant 0 : index
    %c0_4 = arith.constant 0 : index
    %2 = vector.load %arg2[%c0_2, %c0_3, %c0_4] : memref<1x3x256xf32, #tpu.memory_space<vmem>>, vector<1x3x256xf32>
    %3 = vector.shape_cast %2 : vector<1x3x256xf32> to vector<3x256xf32>
    %cst = arith.constant dense<0.000000e+00> : vector<4xf32>
    %4 = vector.multi_reduction <add>, %1, %cst [1] : vector<4x256xf32> to vector<4xf32>
    %5 = vector.shape_cast %4 : vector<4xf32> to vector<4x1xf32>
    %cst_5 = arith.constant 3.906250e-03 : f32
    %6 = vector.broadcast %cst_5 : f32 to vector<4x1xf32>
    %7 = arith.mulf %5, %6 : vector<4x1xf32>
    %8 = vector.broadcast %7 : vector<4x1xf32> to vector<4x256xf32>
    %9 = arith.subf %1, %8 : vector<4x256xf32>
    %10 = arith.mulf %9, %9 : vector<4x256xf32>
    %cst_6 = arith.constant dense<0.000000e+00> : vector<4xf32>
    %11 = vector.multi_reduction <add>, %10, %cst_6 [1] : vector<4x256xf32> to vector<4xf32>
    %12 = vector.shape_cast %11 : vector<4xf32> to vector<4x1xf32>
    %cst_7 = arith.constant 3.906250e-03 : f32
    %13 = vector.broadcast %cst_7 : f32 to vector<4x1xf32>
    %14 = arith.mulf %12, %13 : vector<4x1xf32>
    %cst_8 = arith.constant 9.99999974E-6 : f32
    %15 = vector.broadcast %cst_8 : f32 to vector<4x1xf32>
    %16 = arith.addf %14, %15 : vector<4x1xf32>
    %17 = math.rsqrt %16 : vector<4x1xf32>
    %18 = vector.broadcast %17 : vector<4x1xf32> to vector<4x256xf32>
    %19 = arith.mulf %9, %18 : vector<4x256xf32>
    %c0_9 = arith.constant 0 : index
    %c0_10 = arith.constant 0 : index
    %20 = vector.load %arg3[%c0_9, %c0_10] : memref<32x3xf32, #tpu.memory_space<vmem>>, vector<32x3xf32>
    %cst_11 = arith.constant dense<0.000000e+00> : vector<32x256xf32>
    %21 = tpu.matmul %20, %3, %cst_11 {dimension_numbers = #tpu.dot_dimension_numbers<[1], [0], [0], [1], [0, 0, 1, 1], [], []>} : vector<32x3xf32>, vector<3x256xf32>, vector<32x256xf32> -> vector<32x256xf32>
    %c0_12 = arith.constant 0 : index
    %c0_13 = arith.constant 0 : index
    %22 = vector.load %arg4[%c0_12, %c0_13] : memref<32x1xf32, #tpu.memory_space<vmem>>, vector<32x1xf32>
    %23 = vector.broadcast %22 : vector<32x1xf32> to vector<32x256xf32>
    %24 = arith.addf %21, %23 : vector<32x256xf32>
    %cst_14 = arith.constant 0.000000e+00 : f32
    %25 = vector.broadcast %cst_14 : f32 to vector<32x256xf32>
    %26 = arith.maximumf %24, %25 : vector<32x256xf32>
    %c0_15 = arith.constant 0 : index
    %c0_16 = arith.constant 0 : index
    %27 = vector.load %arg5[%c0_15, %c0_16] : memref<8x32xf32, #tpu.memory_space<vmem>>, vector<8x32xf32>
    %cst_17 = arith.constant dense<0.000000e+00> : vector<8x256xf32>
    %28 = tpu.matmul %27, %26, %cst_17 {dimension_numbers = #tpu.dot_dimension_numbers<[1], [0], [0], [1], [0, 0, 1, 1], [], []>} : vector<8x32xf32>, vector<32x256xf32>, vector<8x256xf32> -> vector<8x256xf32>
    %c0_18 = arith.constant 0 : index
    %c0_19 = arith.constant 0 : index
    %29 = vector.load %arg6[%c0_18, %c0_19] : memref<8x1xf32, #tpu.memory_space<vmem>>, vector<8x1xf32>
    %30 = vector.broadcast %29 : vector<8x1xf32> to vector<8x256xf32>
    %31 = arith.addf %28, %30 : vector<8x256xf32>
    %32 = vector.extract_strided_slice %31 {offsets = [0, 0], sizes = [4, 256], strides = [1, 1]} : vector<8x256xf32> to vector<4x256xf32>
    %33 = vector.extract_strided_slice %31 {offsets = [4, 0], sizes = [4, 256], strides = [1, 1]} : vector<8x256xf32> to vector<4x256xf32>
    %cst_20 = arith.constant 1.000000e+00 : f32
    %34 = vector.broadcast %cst_20 : f32 to vector<4x256xf32>
    %35 = arith.addf %34, %32 : vector<4x256xf32>
    %36 = arith.mulf %19, %35 : vector<4x256xf32>
    %37 = arith.addf %36, %33 : vector<4x256xf32>
    %c0_21 = arith.constant 0 : index
    %c0_22 = arith.constant 0 : index
    %c0_23 = arith.constant 0 : index
    %38 = vector.load %arg7[%c0_21, %c0_22, %c0_23] : memref<1x4x256xf32, #tpu.memory_space<vmem>>, vector<1x4x256xf32>
    %39 = vector.shape_cast %38 : vector<1x4x256xf32> to vector<4x256xf32>
    %40 = vector.shape_cast %37 : vector<4x256xf32> to vector<1x4x256xf32>
    tpu.vector_store %arg7[%c0_21, %c0_22, %c0_23], %40 {strides = array<i32>} : memref<1x4x256xf32, #tpu.memory_space<vmem>>, vector<1x4x256xf32>,
    return
  }
  func.func @transform_0(%arg0: i32) -> (i32, i32, i32) {
    %c0_i32 = arith.constant 0 : i32
    %c0_i32_0 = arith.constant 0 : i32
    %c0_i32_1 = arith.constant 0 : i32
    return %arg0, %c0_i32, %c0_i32_0 : i32, i32, i32
  }
  func.func @transform_1(%arg0: i32) -> (i32, i32, i32) {
    %c0_i32 = arith.constant 0 : i32
    %c0_i32_0 = arith.constant 0 : i32
    %c0_i32_1 = arith.constant 0 : i32
    return %arg0, %c0_i32, %c0_i32_0 : i32, i32, i32
  }
  func.func @transform_2(%arg0: i32) -> (i32, i32) {
    %c0_i32 = arith.constant 0 : i32
    %c0_i32_0 = arith.constant 0 : i32
    %c0_i32_1 = arith.constant 0 : i32
    return %c0_i32, %c0_i32_0 : i32, i32
  }
  func.func @transform_3(%arg0: i32) -> (i32, i32) {
    %c0_i32 = arith.constant 0 : i32
    %c0_i32_0 = arith.constant 0 : i32
    %c0_i32_1 = arith.constant 0 : i32
    return %c0_i32, %c0_i32_0 : i32, i32
  }
  func.func @transform_4(%arg0: i32) -> (i32, i32) {
    %c0_i32 = arith.constant 0 : i32
    %c0_i32_0 = arith.constant 0 : i32
    %c0_i32_1 = arith.constant 0 : i32
    return %c0_i32, %c0_i32_0 : i32, i32
  }
  func.func @transform_5(%arg0: i32) -> (i32, i32) {
    %c0_i32 = arith.constant 0 : i32
    %c0_i32_0 = arith.constant 0 : i32
    %c0_i32_1 = arith.constant 0 : i32
    return %c0_i32, %c0_i32_0 : i32, i32
  }
  func.func @transform_6(%arg0: i32) -> (i32, i32, i32) {
    %c0_i32 = arith.constant 0 : i32
    %c0_i32_0 = arith.constant 0 : i32
    %c0_i32_1 = arith.constant 0 : i32
    return %arg0, %c0_i32, %c0_i32_0 : i32, i32, i32
  }
}

</mosaic_0001>

<llo_original>
// kernel: spade_pallas.1
$region0: #{spade_pallas.1}
  #allocation0 [shape = 'u32[]', space=smem, size = 0x4, offset = 0x4, fixed_abs, tag = 'smem constant byte address 0x4 - core index']
  #allocation1 [shape = 'u32[72,128]{1,0:T(1,128)}', space=vmem, size = 0x9000, scoped, tag = 'internal scratch']
  %s0 = inlined_call_operand.vmem [shape: f32[2,4,256], index: 0, kind: input, shape index: {}]
  %s1 = inlined_call_operand.vmem [shape: f32[2,3,256], index: 1, kind: input, shape index: {}]
  %s2 = inlined_call_operand.vmem [shape: f32[32,3], index: 2, kind: input, shape index: {}]
  %s3 = inlined_call_operand.vmem [shape: f32[32,1], index: 3, kind: input, shape index: {}]
  %s4 = inlined_call_operand.vmem [shape: f32[8,32], index: 4, kind: input, shape index: {}]
  %s5 = inlined_call_operand.vmem [shape: f32[8,1], index: 5, kind: input, shape index: {}]
  %s6 = inlined_call_operand.vmem [shape: f32[2,4,256], index: 6, kind: output, shape index: {}]
  %s7 = sld [smem:[#allocation0]]
  $region57: #{spade_pallas.1} parent=0
    _
  %s9 = ssub.s32 1, %s7
  %s10 = scalar_select 0, %s9, %s7
  loop: start=0, step=1, limit=4
  $region2: #{spade_pallas.1} parent=0 // loop_pre_header
    _
  $region3: #{spade_pallas.1} parent=0 // loop_header
    %s12 = sphi 0, %s16
    %p13 = scmp.ge.s32.totalorder %s12, 4
    %s22 = sphi 0, %s24
    %s25 = sphi 0, %s22
    %s26 = sphi 0, %s25
    %s42 = sphi 0, %s26
    %s48 = sphi 0, %s50
    %s51 = sphi 0, %s48
    %s52 = sphi 0, %s51
    %s68 = sphi 0, %s52
    %s72 = sphi 0, %s72
    %s74 = sphi 0, %s72
    %s75 = sphi 0, %s74
    %s89 = sphi 0, %s75
    %s93 = sphi 0, %s93
    %s95 = sphi 0, %s93
    %s96 = sphi 0, %s95
    %s110 = sphi 0, %s96
    %s114 = sphi 0, %s114
    %s116 = sphi 0, %s114
    %s117 = sphi 0, %s116
    %s131 = sphi 0, %s117
    %s135 = sphi 0, %s135
    %s137 = sphi 0, %s135
    %s138 = sphi 0, %s137
    %s152 = sphi 0, %s138
    %s158 = sphi 0, %s160
    %s161 = sphi 0, %s158
    %s162 = sphi 0, %s161
    %s178 = sphi 0, %s162
  $region4: #{spade_pallas.1} parent=0 // loop_header_branch
    %15 = sbr.rel (%p13) target = $region8
  $region5: #{spade_pallas.1} parent=0 // loop_body
    %s17 = ssub.s32 %s12, 1
    %s18 = ssub.s32 %s12, 2
    %s19 = sadd.s32 %s12, 1
    %s20 = ssub.s32 %s12, %s19
    %p21 = scmp.eq.s32.totalorder %s20, 0
    %s23 = sadd.s32 %s22, 1
    %s24 = scalar_select %p21, %s22, %s23
    %p27 = pneg %p21
    %p28 = scmp.eq.s32.totalorder %s12, 1
    %p29 = por %p27, %p28
    %p30 = scmp.ne.s32.totalorder %s22, %s25
    %p31 = scmp.eq.s32.totalorder %s12, 0
    %p32 = por %p30, %p31
    %p33 = scmp.ne.s32.totalorder %s22, %s25
    %p34 = scmp.eq.s32.totalorder %s17, 1
    %p35 = por %p33, %p34
    %p36 = scmp.ne.s32.totalorder %s25, %s26
    %p37 = scmp.eq.s32.totalorder %s17, 0
    %p38 = por %p36, %p37
    %p39 = scmp.ne.s32.totalorder %s25, %s26
    %p40 = scmp.eq.s32.totalorder %s18, 1
    %p41 = por %p39, %p40
    %p43 = scmp.ne.s32.totalorder %s26, %s42
    %p44 = scmp.eq.s32.totalorder %s18, 0
    %p45 = por %p43, %p44
    %s46 = ssub.s32 %s12, %s19
    %p47 = scmp.eq.s32.totalorder %s46, 0
    %s49 = sadd.s32 %s48, 1
    %s50 = scalar_select %p47, %s48, %s49
    %p53 = pneg %p47
    %p54 = scmp.eq.s32.totalorder %s12, 1
    %p55 = por %p53, %p54
    %p56 = scmp.ne.s32.totalorder %s48, %s51
    %p57 = scmp.eq.s32.totalorder %s12, 0
    %p58 = por %p56, %p57
    %p59 = scmp.ne.s32.totalorder %s48, %s51
    %p60 = scmp.eq.s32.totalorder %s17, 1
    %p61 = por %p59, %p60
    %p62 = scmp.ne.s32.totalorder %s51, %s52
    %p63 = scmp.eq.s32.totalorder %s17, 0
    %p64 = por %p62, %p63
    %p65 = scmp.ne.s32.totalorder %s51, %s52
    %p66 = scmp.eq.s32.totalorder %s18, 1
    %p67 = por %p65, %p66
    %p69 = scmp.ne.s32.totalorder %s52, %s68
    %p70 = scmp.eq.s32.totalorder %s18, 0
    %p71 = por %p69, %p70
    %s73 = sadd.s32 %s72, 1
    %p76 = scmp.eq.s32.totalorder %s12, 1
    %p77 = scmp.ne.s32.totalorder %s72, %s74
    %p78 = scmp.eq.s32.totalorder %s12, 0
    %p79 = por %p77, %p78
    %p80 = scmp.ne.s32.totalorder %s72, %s74
    %p81 = scmp.eq.s32.totalorder %s17, 1
    %p82 = por %p80, %p81
    %p83 = scmp.ne.s32.totalorder %s74, %s75
    %p84 = scmp.eq.s32.totalorder %s17, 0
    %p85 = por %p83, %p84
    %p86 = scmp.ne.s32.totalorder %s74, %s75
    %p87 = scmp.eq.s32.totalorder %s18, 1
    %p88 = por %p86, %p87
    %p90 = scmp.ne.s32.totalorder %s75, %s89
    %p91 = scmp.eq.s32.totalorder %s18, 0
    %p92 = por %p90, %p91
    %s94 = sadd.s32 %s93, 1
    %p97 = scmp.eq.s32.totalorder %s12, 1
    %p98 = scmp.ne.s32.totalorder %s93, %s95
    %p99 = scmp.eq.s32.totalorder %s12, 0
    %p100 = por %p98, %p99
    %p101 = scmp.ne.s32.totalorder %s93, %s95
    %p102 = scmp.eq.s32.totalorder %s17, 1
    %p103 = por %p101, %p102
    %p104 = scmp.ne.s32.totalorder %s95, %s96
    %p105 = scmp.eq.s32.totalorder %s17, 0
    %p106 = por %p104, %p105
    %p107 = scmp.ne.s32.totalorder %s95, %s96
    %p108 = scmp.eq.s32.totalorder %s18, 1
    %p109 = por %p107, %p108
    %p111 = scmp.ne.s32.totalorder %s96, %s110
    %p112 = scmp.eq.s32.totalorder %s18, 0
    %p113 = por %p111, %p112
    %s115 = sadd.s32 %s114, 1
    %p118 = scmp.eq.s32.totalorder %s12, 1
    %p119 = scmp.ne.s32.totalorder %s114, %s116
    %p120 = scmp.eq.s32.totalorder %s12, 0
    %p121 = por %p119, %p120
    %p122 = scmp.ne.s32.totalorder %s114, %s116
    %p123 = scmp.eq.s32.totalorder %s17, 1
    %p124 = por %p122, %p123
    %p125 = scmp.ne.s32.totalorder %s116, %s117
    %p126 = scmp.eq.s32.totalorder %s17, 0
    %p127 = por %p125, %p126
    %p128 = scmp.ne.s32.totalorder %s116, %s117
    %p129 = scmp.eq.s32.totalorder %s18, 1
    %p130 = por %p128, %p129
    %p132 = scmp.ne.s32.totalorder %s117, %s131
    %p133 = scmp.eq.s32.totalorder %s18, 0
    %p134 = por %p132, %p133
    %s136 = sadd.s32 %s135, 1
    %p139 = scmp.eq.s32.totalorder %s12, 1
    %p140 = scmp.ne.s32.totalorder %s135, %s137
    %p141 = scmp.eq.s32.totalorder %s12, 0
    %p142 = por %p140, %p141
    %p143 = scmp.ne.s32.totalorder %s135, %s137
    %p144 = scmp.eq.s32.totalorder %s17, 1
    %p145 = por %p143, %p144
    %p146 = scmp.ne.s32.totalorder %s137, %s138
    %p147 = scmp.eq.s32.totalorder %s17, 0
    %p148 = por %p146, %p147
    %p149 = scmp.ne.s32.totalorder %s137, %s138
    %p150 = scmp.eq.s32.totalorder %s18, 1
    %p151 = por %p149, %p150
    %p153 = scmp.ne.s32.totalorder %s138, %s152
    %p154 = scmp.eq.s32.totalorder %s18, 0
    %p155 = por %p153, %p154
    %s156 = ssub.s32 %s12, %s19
    %p157 = scmp.eq.s32.totalorder %s156, 0
    %s159 = sadd.s32 %s158, 1
    %s160 = scalar_select %p157, %s158, %s159
    %p163 = pneg %p157
    %p164 = scmp.eq.s32.totalorder %s12, 1
    %p165 = por %p163, %p164
    %p166 = scmp.ne.s32.totalorder %s158, %s161
    %p167 = scmp.eq.s32.totalorder %s12, 0
    %p168 = por %p166, %p167
    %p169 = scmp.ne.s32.totalorder %s158, %s161
    %p170 = scmp.eq.s32.totalorder %s17, 1
    %p171 = por %p169, %p170
    %p172 = scmp.ne.s32.totalorder %s161, %s162
    %p173 = scmp.eq.s32.totalorder %s17, 0
    %p174 = por %p172, %p173
    %p175 = scmp.ne.s32.totalorder %s161, %s162
    %p176 = scmp.eq.s32.totalorder %s18, 1
    %p177 = por %p175, %p176
    %p179 = scmp.ne.s32.totalorder %s162, %s178
    %p180 = scmp.eq.s32.totalorder %s18, 0
    %p181 = por %p179, %p180
    %p182 = scmp.le.s32.totalorder 1, %s12
    %p183 = scmp.lt.s32.totalorder %s12, 3
    %p184 = pnand %p182, %p183
    %p185 = pneg %p184
    // Predicated region
    $region9: #{spade_pallas.1} parent=5 // pred_check
      _
    $region10: #{spade_pallas.1} parent=5 // pred_check_branch
      %187 = sbr.rel (%p184) target = $region12
    $region11: #{spade_pallas.1} parent=5 // pred_region
      %s188 = ssub.s32 %s12, 1
      // Predicated region
      $region13: #{spade_pallas.1} parent=11 // pred_check
        %p189 = pneg %p85
      $region14: #{spade_pallas.1} parent=11 // pred_check_branch
        %191 = sbr.rel (%p189) target = $region16
      $region15: #{spade_pallas.1} parent=11 // pred_region
        _
      $region16: #{spade_pallas.1} parent=11 // pred_fallthru
        _
      // Predicated region
      $region17: #{spade_pallas.1} parent=11 // pred_check
        %p192 = pneg %p106
      $region18: #{spade_pallas.1} parent=11 // pred_check_branch
        %194 = sbr.rel (%p192) target = $region20
      $region19: #{spade_pallas.1} parent=11 // pred_region
        _
      $region20: #{spade_pallas.1} parent=11 // pred_fallthru
        _
      // Predicated region
      $region21: #{spade_pallas.1} parent=11 // pred_check
        %p195 = pneg %p127
      $region22: #{spade_pallas.1} parent=11 // pred_check_branch
        %197 = sbr.rel (%p195) target = $region24
      $region23: #{spade_pallas.1} parent=11 // pred_region
        _
      $region24: #{spade_pallas.1} parent=11 // pred_fallthru
        _
      // Predicated region
      $region25: #{spade_pallas.1} parent=11 // pred_check
        %p198 = pneg %p148
      $region26: #{spade_pallas.1} parent=11 // pred_check_branch
        %200 = sbr.rel (%p198) target = $region28
      $region27: #{spade_pallas.1} parent=11 // pred_region
        _
      $region28: #{spade_pallas.1} parent=11 // pred_fallthru
        _
    $region12: #{spade_pallas.1} parent=5 // pred_fallthru
      _
    %p201 = scmp.lt.s32.totalorder %s12, 2
    // Predicated region
    $region29: #{spade_pallas.1} parent=5 // pred_check
      %p202 = pneg %p201
    $region30: #{spade_pallas.1} parent=5 // pred_check_branch
      %204 = sbr.rel (%p202) target = $region32
    $region31: #{spade_pallas.1} parent=5 // pred_region
      // Predicated region
      $region33: #{spade_pallas.1} parent=31 // pred_check
        %p205 = pneg %p32
      $region34: #{spade_pallas.1} parent=31 // pred_check_branch
        %207 = sbr.rel (%p205) target = $region36
      $region35: #{spade_pallas.1} parent=31 // pred_region
        %p208 = scmp.lt.s32.totalorder %s12, 1
        %s209 = scalar_select %p208, %s12, 1
        %s210 = smul.addr %s209, 2
        %s211 = smul.addr %s210, 4
        %s212 = scalar_lea.vmem %s0, %s211
      $region36: #{spade_pallas.1} parent=31 // pred_fallthru
        _
      // Predicated region
      $region37: #{spade_pallas.1} parent=31 // pred_check
        %p213 = pneg %p58
      $region38: #{spade_pallas.1} parent=31 // pred_check_branch
        %215 = sbr.rel (%p213) target = $region40
      $region39: #{spade_pallas.1} parent=31 // pred_region
        %p216 = scmp.lt.s32.totalorder %s12, 1
        %s217 = scalar_select %p216, %s12, 1
        %s218 = smul.addr %s217, 2
        %s219 = smul.addr %s218, 4
        %s220 = scalar_lea.vmem %s1, %s219
      $region40: #{spade_pallas.1} parent=31 // pred_fallthru
        _
    $region32: #{spade_pallas.1} parent=5 // pred_fallthru
      _
    %p221 = scmp.le.s32.totalorder 1, %s12
    %p222 = scmp.lt.s32.totalorder %s12, 3
    %p223 = pnand %p221, %p222
    %p224 = pneg %p223
    // Predicated region
    $region41: #{spade_pallas.1} parent=5 // pred_check
      _
    $region42: #{spade_pallas.1} parent=5 // pred_check_branch
      %226 = sbr.rel (%p223) target = $region44
    $region43: #{spade_pallas.1} parent=5 // pred_region
      %s227 = ssub.s32 %s12, 1
      %p228 = scmp.lt.s32.totalorder %s17, 1
      %s229 = scalar_select %p228, %s17, 1
      %s230 = smul.addr %s229, 2
      %s231 = smul.addr %s230, 4
      %s232 = scalar_lea.vmem %s0, %s231
      %p233 = pneg %p38
      %p234 = pneg %p35
      %p235 = scmp.lt.s32.totalorder %s17, 1
      %s236 = scalar_select %p235, %s17, 1
      %s237 = smul.addr %s236, 2
      %s238 = smul.addr %s237, 4
      %s239 = scalar_lea.vmem %s1, %s238
      %p240 = pneg %p64
      %p241 = pneg %p61
      %p242 = pneg %p85
      %p243 = pneg %p82
      %p244 = pneg %p106
      %p245 = pneg %p103
      %p246 = pneg %p127
      %p247 = pneg %p124
      %p248 = pneg %p148
      %p249 = pneg %p145
      %p250 = pneg %p174
      %p251 = pneg %p171
      %p252 = scmp.lt.s32.totalorder %s17, 1
      %s253 = scalar_select %p252, %s17, 1
      %s254 = smul.addr %s253, 2
      %s255 = smul.addr %s254, 4
      %s256 = scalar_lea.vmem %s6, %s255
      %p257 = scmp.lt.s32.totalorder %s17, 1
      %s258 = scalar_select %p257, %s17, 1
      %s259 = smul.addr %s258, 2
      %s260 = smul.addr %s259, 4
      %s261 = scalar_lea.vmem %s0, %s260
      %p262 = scmp.lt.s32.totalorder %s17, 1
      %s263 = scalar_select %p262, %s17, 1
      %s264 = smul.addr %s263, 2
      %s265 = smul.addr %s264, 4
      %s266 = scalar_lea.vmem %s1, %s265
      %p267 = scmp.lt.s32.totalorder %s17, 1
      %s268 = scalar_select %p267, %s17, 1
      %s269 = smul.addr %s268, 2
      %s270 = smul.addr %s269, 4
      %s271 = scalar_lea.vmem %s6, %s270
      %v272 = vld [vmem:[%s261] sm:$0xff]
      %v273 = vld [vmem:[%s266] sm:$0x77]
      %275 = vst [vmem:[#allocation1] ss:$2 sm:$0xff] %v272
      %v276 = vld.sshfl [vmem:[#allocation1] sm:$0xff pattern:$0x75316420]
      %v277 = vld.sshfl [vmem:[#allocation1 + $0x8] sm:$0xff pattern:$0x75316420]
      %vm280 = vcmask 1043456
      %v281 = vsel %vm280, %v276, 0.0
      %v282 = vsel %vm280, %v277, 0.0
      %v283 = vadd.f32 %v281, %v282
      %284 = vadd.xlane.f32.xlu0 %v283
      %v285 = vpop.xlane.xlu0 %284
      %v286 = vmul.f32 %v285, 0.00390625
      %v289 = vunpack.c.l.s4 839922192
      %v290 = vunpack.c.0.s8 %v289
      %v291 = vperm.slane %v286, %v290
      %v293 = vsub.f32 %v272, %v291
      %v294 = vmul.f32 %v293, %v293
      %296 = vst [vmem:[#allocation1] ss:$2 sm:$0xff] %v294
      %v297 = vld.sshfl [vmem:[#allocation1] sm:$0xff pattern:$0x75316420]
      %v298 = vld.sshfl [vmem:[#allocation1 + $0x8] sm:$0xff pattern:$0x75316420]
      %v301 = vsel %vm280, %v297, 0.0
      %v302 = vsel %vm280, %v298, 0.0
      %v303 = vadd.f32 %v301, %v302
      %304 = vadd.xlane.f32.xlu0 %v303
      %v305 = vpop.xlane.xlu0 %304
      %v306 = vmul.f32 %v305, 0.00390625
      %v307 = vadd.f32 %v306, 1e-05
      %v308 = vrsqrt.pop %v307
      %v309 = vmul.f32 %v308, %v307
      %v310 = vmul.f32 %v309, %v308
      %v311 = vmul.f32 0.5, %v310
      %v312 = vsub.f32 1.5, %v311
      %v313 = vmul.f32 %v308, %v312
      %vm314 = vweird.f32 %v307
      %vm315 = vweird.f32 %v308
      %vm316 = vmor %vm314, %vm315
      %v317 = vsel %vm316, %v308, %v313
      %v320 = vunpack.c.l.s4 839922192
      %v321 = vunpack.c.0.s8 %v320
      %v322 = vperm.slane %v317, %v321
      %v324 = vmul.f32 %v293, %v322
      %v325 = vld [vmem:[%s2] sm:$0xff]
      %v326 = vld [vmem:[%s2 + $0x8] sm:$0xff]
      %v327 = vld [vmem:[%s2 + $0x10] sm:$0xff]
      %v328 = vld [vmem:[%s2 + $0x18] sm:$0xff]
      %v329 = vld [vmem:[%s3] sm:$0xff]
      %v330 = vld [vmem:[%s3 + $0x8] sm:$0xff]
      %v331 = vld [vmem:[%s3 + $0x10] sm:$0xff]
      %v332 = vld [vmem:[%s3 + $0x18] sm:$0xff]
      %334 = vset.pattern.permute.xlu0 0
      %335 = vperm.xlu0 %334, %v329
      %v336 = vpop.permute.xlu0 %335
      %339 = vset.pattern.permute.xlu0 0
      %340 = vperm.xlu0 %339, %v330
      %v341 = vpop.permute.xlu0 %340
      %344 = vset.pattern.permute.xlu0 0
      %345 = vperm.xlu0 %344, %v331
      %v346 = vpop.permute.xlu0 %345
      %349 = vset.pattern.permute.xlu0 0
      %350 = vperm.xlu0 %349, %v332
      %v351 = vpop.permute.xlu0 %350
      %354 = vst [vmem:[#allocation1] ss:$2 sm:$0xff] %v273
      %v355 = vld.sshfl [vmem:[#allocation1] sm:$0xff pattern:$0x75316420]
      %v356 = vld.sshfl [vmem:[#allocation1 + $0x8] sm:$0xff pattern:$0x75316420]
      %vm357 = vcmask 23552
      %v359 = vsel %vm357, %v325, 0
      %v362 = vsel %vm357, %v326, 0
      %v365 = vsel %vm357, %v327, 0
      %v368 = vsel %vm357, %v328, 0
      %vm370 = vcmask 1042432
      %v371 = vsel %vm370, %v355, 0
      %v373 = vsel %vm370, %v356, 0
      %375 = vmatpush.msra.mxu0 0.0
      %376 = vmatpush.msra.mxu0 0.0
      %377 = vmatpush.msra.mxu0 0.0
      %378 = vmatpush.msra.mxu0 0.0
      %379 = vmatpush.msra.mxu0 0.0
      %380 = vmatpush.msra.mxu0 0.0
      %381 = vmatpush.msra.mxu0 0.0
      %382 = vmatpush.msra.mxu0 0.0
      %383 = vmatpush.msra.mxu0 0.0
      %384 = vmatpush.msra.mxu0 0.0
      %385 = vmatpush.msra.mxu0 0.0
      %386 = vmatpush.msra.mxu0 0.0
      %387 = vmatpush.msra.mxu0 0.0
      %388 = vmatpush.msra.mxu0 0.0
      %389 = vmatpush.msra.mxu0 0.0
      %390 = vmatpush.msra.mxu0 %v371
      %391 = vmatmul.f32.gmra.mxu0 %v359
      %v392 = vpop.f32.mrf.mxu0
      %v393 = vadd.f32 %v336, %v392
      %394 = vmatmul.f32.gmra.mxu0 %v362
      %v395 = vpop.f32.mrf.mxu0
      %v396 = vadd.f32 %v341, %v395
      %397 = vmatmul.f32.gmra.mxu0 %v365
      %v398 = vpop.f32.mrf.mxu0
      %v399 = vadd.f32 %v346, %v398
      %400 = vmatmul.f32.gmra.mxu0 %v368
      %v401 = vpop.f32.mrf.mxu0
      %v402 = vadd.f32 %v351, %v401
      %403 = vdwg.mxu0
      %404 = vmatpush.msra.mxu0 0.0
      %405 = vmatpush.msra.mxu0 0.0
      %406 = vmatpush.msra.mxu0 0.0
      %407 = vmatpush.msra.mxu0 0.0
      %408 = vmatpush.msra.mxu0 0.0
      %409 = vmatpush.msra.mxu0 0.0
      %410 = vmatpush.msra.mxu0 0.0
      %411 = vmatpush.msra.mxu0 0.0
      %412 = vmatpush.msra.mxu0 0.0
      %413 = vmatpush.msra.mxu0 0.0
      %414 = vmatpush.msra.mxu0 0.0
      %415 = vmatpush.msra.mxu0 0.0
      %416 = vmatpush.msra.mxu0 0.0
      %417 = vmatpush.msra.mxu0 0.0
      %418 = vmatpush.msra.mxu0 0.0
      %419 = vmatpush.msra.mxu0 %v373
      %420 = vmatmul.f32.gmra.mxu0 %v359
      %v421 = vpop.f32.mrf.mxu0
      %v422 = vadd.f32 %v336, %v421
      %423 = vmatmul.f32.gmra.mxu0 %v362
      %v424 = vpop.f32.mrf.mxu0
      %v425 = vadd.f32 %v341, %v424
      %426 = vmatmul.f32.gmra.mxu0 %v365
      %v427 = vpop.f32.mrf.mxu0
      %v428 = vadd.f32 %v346, %v427
      %429 = vmatmul.f32.gmra.mxu0 %v368
      %v430 = vpop.f32.mrf.mxu0
      %v431 = vadd.f32 %v351, %v430
      %432 = vdwg.mxu0
      %v433 = vmax.f32 %v393, 0.0
      %v434 = vmax.f32 %v422, 0.0
      %v435 = vmax.f32 %v396, 0.0
      %v436 = vmax.f32 %v425, 0.0
      %v437 = vmax.f32 %v399, 0.0
      %v438 = vmax.f32 %v428, 0.0
      %v439 = vmax.f32 %v402, 0.0
      %v440 = vmax.f32 %v431, 0.0
      %v441 = vld [vmem:[%s4] sm:$0xff]
      %v442 = vld [vmem:[%s5] sm:$0xff]
      %444 = vset.pattern.permute.xlu0 0
      %445 = vperm.xlu0 %444, %v442
      %v446 = vpop.permute.xlu0 %445
      %vm448 = vcmask 261120
      %v450 = vsel %vm448, %v441, 0
      %452 = vmatpush.msra.mxu0 0.0
      %453 = vmatpush.msra.mxu0 0.0
      %454 = vmatpush.msra.mxu0 0.0
      %455 = vmatpush.msra.mxu0 0.0
      %456 = vmatpush.msra.mxu0 0.0
      %457 = vmatpush.msra.mxu0 0.0
      %458 = vmatpush.msra.mxu0 0.0
      %459 = vmatpush.msra.mxu0 0.0
      %460 = vmatpush.msra.mxu0 0.0
      %461 = vmatpush.msra.mxu0 0.0
      %462 = vmatpush.msra.mxu0 0.0
      %463 = vmatpush.msra.mxu0 0.0
      %464 = vmatpush.msra.mxu0 %v439
      %465 = vmatpush.msra.mxu0 %v437
      %466 = vmatpush.msra.mxu0 %v435
      %467 = vmatpush.msra.mxu0 %v433
      %468 = vmatmul.f32.gmra.mxu0 %v450
      %v469 = vpop.f32.mrf.mxu0
      %v470 = vadd.f32 %v446, %v469
      %471 = vdwg.mxu0
      %472 = vmatpush.msra.mxu0 0.0
      %473 = vmatpush.msra.mxu0 0.0
      %474 = vmatpush.msra.mxu0 0.0
      %475 = vmatpush.msra.mxu0 0.0
      %476 = vmatpush.msra.mxu0 0.0
      %477 = vmatpush.msra.mxu0 0.0
      %478 = vmatpush.msra.mxu0 0.0
      %479 = vmatpush.msra.mxu0 0.0
      %480 = vmatpush.msra.mxu0 0.0
      %481 = vmatpush.msra.mxu0 0.0
      %482 = vmatpush.msra.mxu0 0.0
      %483 = vmatpush.msra.mxu0 0.0
      %484 = vmatpush.msra.mxu0 %v440
      %485 = vmatpush.msra.mxu0 %v438
      %486 = vmatpush.msra.mxu0 %v436
      %487 = vmatpush.msra.mxu0 %v434
      %488 = vmatmul.f32.gmra.mxu0 %v450
      %v489 = vpop.f32.mrf.mxu0
      %v490 = vadd.f32 %v446, %v489
      %491 = vdwg.mxu0
      %v492 = vadd.f32 %v470, 1.0
      %v493 = vadd.f32 %v490, 1.0
      %v496 = vrot.slane %v493, 4
      %v497 = vsel %vm280, %v492, %v496
      %v499 = vmul.f32 %v324, %v497
      %502 = vst.sshfl [vmem:[#allocation1] sm:$0xff pattern:$0x75316420] %v470
      %503 = vst.sshfl [vmem:[#allocation1 + $0x8] sm:$0xff pattern:$0x75316420] %v490
      %s504 = scalar_lea.vmem [#allocation1], 1
      %v505 = vld [vmem:[%s504] ss:$2 sm:$0xff]
      %v507 = vadd.f32 %v499, %v505
      %508 = vst [vmem:[%s271] sm:$0xff] %v507
      %p509 = scmp.lt.s32.totalorder %s17, 1
      %s510 = scalar_select %p509, %s17, 1
      %s511 = smul.addr %s510, 2
      %s512 = smul.addr %s511, 4
      %s513 = scalar_lea.vmem %s6, %s512
      // Predicated region
      $region45: #{spade_pallas.1} parent=43 // pred_check
        %p514 = pneg %p171
      $region46: #{spade_pallas.1} parent=43 // pred_check_branch
        %516 = sbr.rel (%p514) target = $region48
      $region47: #{spade_pallas.1} parent=43 // pred_region
        _
      $region48: #{spade_pallas.1} parent=43 // pred_fallthru
        _
    $region44: #{spade_pallas.1} parent=5 // pred_fallthru
      _
    %p517 = scmp.le.s32.totalorder 2, %s12
    // Predicated region
    $region49: #{spade_pallas.1} parent=5 // pred_check
      %p518 = pneg %p517
    $region50: #{spade_pallas.1} parent=5 // pred_check_branch
      %520 = sbr.rel (%p518) target = $region52
    $region51: #{spade_pallas.1} parent=5 // pred_region
      %s521 = ssub.s32 %s12, 2
      // Predicated region
      $region53: #{spade_pallas.1} parent=51 // pred_check
        %p522 = pneg %p177
      $region54: #{spade_pallas.1} parent=51 // pred_check_branch
        %524 = sbr.rel (%p522) target = $region56
      $region55: #{spade_pallas.1} parent=51 // pred_region
        %p525 = scmp.lt.s32.totalorder %s18, 1
        %s526 = scalar_select %p525, %s18, 1
        %s527 = smul.addr %s526, 2
        %s528 = smul.addr %s527, 4
        %s529 = scalar_lea.vmem %s6, %s528
      $region56: #{spade_pallas.1} parent=51 // pred_fallthru
        _
    $region52: #{spade_pallas.1} parent=5 // pred_fallthru
      _
  $region6: #{spade_pallas.1} parent=0 // loop_footer
    %s16 = sadd.s32 1, %s12
  $region7: #{spade_pallas.1} parent=0 // loop_footer_branch
    %11 = sbr.rel target = $region3
  $region8: #{spade_pallas.1} parent=0 // loop_exit
    _

</llo_original>
